<compile_context>
chip_gen: v5e
topology: v5e:2x2
jax: 0.10.0
libtpu: 0.0.40
codegen_flags: <defaults>
</compile_context>

<pallas_src>
import functools

import numpy as np
import jax
import jax.numpy as jnp
from jax import lax
from jax.experimental import pallas as pl
from jax.experimental.pallas import tpu as pltpu


def _round_up(v, m):
    return (v + m - 1) // m * m


def _vmem_plan():
    """Generation-aware (vmem_budget_bytes, rows-per-step target)."""
    cap = 128 * 1024 * 1024
    try:
        info_fn = getattr(pltpu, "get_tpu_info", None)
        if info_fn is not None:
            cap = getattr(info_fn(), "vmem_capacity_bytes", cap) or cap
    except Exception:
        pass
    if cap <= 64 * 1024 * 1024:
        # v7x-class: leave headroom under the 64 MiB physical per-TC VMEM.
        return 48 * 1024 * 1024, 384
    # v5e / v6e: 128 MiB physical (scoped defaults are only 16/32 MiB).
    return 100 * 1024 * 1024, 1024


def _sdp_attn_kernel(n_ref, x_ref, w_ref, bq_ref, bk_ref, bv_ref, o_ref, qkv_s,
                     *, d_k, decoding, bt, seq, seq_valid, d, dpad):
    """One grid step processes `bt` batches.

    n_ref  : (1,)              int32 (SMEM)   valid length
    x_ref  : (bt*seq, E)       bf16           flattened input rows
    w_ref  : (E, 3*dpad)       bf16           fused, lane-padded [Wq | Wk | Wv]
    b*_ref : (bt*seq, d)       bf16           per-projection biases (unfused)
    o_ref  : (bt*seq, dpad)    bf16           lane-dense padded output
    qkv_s  : (3, bt*seq, dpad) bf16 VMEM      Q/K/V scratch
    """
    n = n_ref[0]
    s = seq

    # Zero the scratch every step so the lane-padded tail of Q/K/V is exactly 0
    # (keeps the Dpad-wide contractions exact; safe under megacore grid splits).
    qkv_s[...] = jnp.zeros_like(qkv_s)

    # Fused, lane-padded QKV projection: one bf16 MXU pass (M=bt*seq, N=3*dpad),
    # f32 accumulation.  Padded weight columns are zero -> padded proj cols are 0.
    proj = jnp.dot(x_ref[...], w_ref[...], preferred_element_type=jnp.float32)

    # Bias adds in f32, then one bulk f32->bf16 store per projection.  Slice
    # offsets 0 / dpad / 2*dpad are lane-tile aligned (no lane-shift relayout).
    qkv_s[0, :, :d] = (proj[:, 0 * dpad:0 * dpad + d]
                       + bq_ref[...].astype(jnp.float32)).astype(jnp.bfloat16)
    qkv_s[1, :, :d] = (proj[:, 1 * dpad:1 * dpad + d]
                       + bk_ref[...].astype(jnp.float32)).astype(jnp.bfloat16)
    qkv_s[2, :, :d] = (proj[:, 2 * dpad:2 * dpad + d]
                       + bv_ref[...].astype(jnp.float32)).astype(jnp.bfloat16)

    # Mask, built once (loop-invariant) from broadcast 1-D iotas.
    col = lax.broadcasted_iota(jnp.int32, (1, s), 1)
    row = lax.broadcasted_iota(jnp.int32, (s, 1), 0)
    keep = jnp.maximum(col, row) < n           # PadMasking: (row < n) & (col < n)
    if decoding:
        keep = keep & (col <= row)             # SubMasking (causal)

    scale = jnp.float32(1.0 / np.sqrt(d_k))
    neg_big = jnp.float32(-1.0e9)

    def _one_batch(b, carry):
        r0 = pl.multiple_of(b * s, s)
        qb = qkv_s[0, pl.ds(r0, s), :]         # (s, dpad) bf16, lane-dense loads
        kb = qkv_s[1, pl.ds(r0, s), :]
        vb = qkv_s[2, pl.ds(r0, s), :]

        # Q @ K^T as an NT contraction on the MXU (no materialized transpose).
        sc = lax.dot_general(
            qb, kb, dimension_numbers=(((1,), (1,)), ((), ())),
            preferred_element_type=jnp.float32) * scale
        sc = jnp.where(keep, sc, neg_big)      # exact -1e9, matching PadMasking
        if seq_valid != s:
            # Structurally padded key columns (seq padded to a multiple of 8)
            # must drop out even of fully-masked (uniform-softmax) rows.
            sc = jnp.where(col < seq_valid, sc, -jnp.inf)

        m = jnp.max(sc, axis=-1, keepdims=True)
        ex = jnp.exp(sc - m)                   # f32 exp (exact on v5e too)
        p = ex * pl.reciprocal(jnp.sum(ex, axis=-1, keepdims=True), approx=True)

        out = jnp.dot(p.astype(jnp.bfloat16), vb,
                      preferred_element_type=jnp.float32)
        # Full 128-lane unmasked store (lane-dense out_spec), bf16 writeback.
        o_ref[pl.ds(r0, s), :] = out.astype(o_ref.dtype)
        return carry

    lax.fori_loop(0, bt, _one_batch, 0, unroll=bt <= 8)


def sdp_attn(x, n, wq, wk, wv, bq, bk, bv, *, d_k, decoding):
    B, S, E = x.shape
    D = wq.shape[1]
    Dpad = _round_up(D, 128)                   # lane-dense padding of d_model
    Sp = _round_up(S, 8)                       # keep the 8-aligned grid path

    # Fused, lane-padded QKV weight (tiny; only the first D of each 128-lane
    # block is non-zero so padded Q/K dims and padded V/output columns are 0).
    bf16 = jnp.bfloat16
    w_pad = jnp.zeros((E, 3 * Dpad), bf16)
    w_pad = w_pad.at[:, 0 * Dpad:0 * Dpad + D].set(wq.astype(bf16))
    w_pad = w_pad.at[:, 1 * Dpad:1 * Dpad + D].set(wk.astype(bf16))
    w_pad = w_pad.at[:, 2 * Dpad:2 * Dpad + D].set(wv.astype(bf16))

    def _flat(a, last):
        # (B, S, last) -> (B*Sp, last) bf16; zero rows for the padded seq tail.
        if Sp != S:
            a = jnp.pad(a, ((0, 0), (0, Sp - S), (0, 0)))
        return a.reshape(B * Sp, last).astype(bf16)

    x_flat = _flat(x, E)
    bq_flat = _flat(bq, D)                     # unfused bias streams (no concat)
    bk_flat = _flat(bk, D)
    bv_flat = _flat(bv, D)

    vmem_budget, rows_target = _vmem_plan()

    # Batches per grid step: largest divisor of B whose row count fits the
    # per-generation target, while keeping >= 2 grid steps when possible
    # (v7x megacore split of the "parallel" axis + DMA prefetch of step i+1).
    max_bt = max(1, min(B, rows_target // Sp)) if Sp <= rows_target else 1
    divisors = [dd for dd in range(1, B + 1) if B % dd == 0 and dd <= max_bt]
    preferred = [dd for dd in divisors if B // dd >= 2]
    bt = max(preferred) if preferred else max(divisors)

    def _vmem_est(bt_):
        rows_ = bt_ * Sp
        return (2 * rows_ * E * 2              # x blocks (bf16, double-buffered)
                + 3 * 2 * rows_ * D * 2        # bias blocks (bf16)
                + 2 * rows_ * Dpad * 2         # output blocks (bf16)
                + 2 * E * 3 * Dpad * 2         # fused weight (bf16)
                + 3 * rows_ * Dpad * 2         # qkv scratch (bf16)
                + rows_ * 3 * Dpad * 4         # f32 projection temporary
                + 6 * Sp * Sp * 4 + 2 * Sp * Dpad * 4)   # per-batch temporaries

    while bt > 1 and _vmem_est(bt) > vmem_budget // 2:
        bt = max(dd for dd in divisors if dd < bt)
    rows = bt * Sp

    vmem_limit = int(min(max(2 * _vmem_est(bt), 32 * 1024 * 1024), vmem_budget))

    n_arr = jnp.asarray([n], dtype=jnp.int32)
    kernel = functools.partial(_sdp_attn_kernel, d_k=d_k, decoding=decoding,
                               bt=bt, seq=Sp, seq_valid=S, d=D, dpad=Dpad)

    grid_spec = pltpu.PrefetchScalarGridSpec(
        num_scalar_prefetch=1,
        grid=(B // bt,),
        in_specs=[
            pl.BlockSpec((rows, E), lambda i, n_ref: (i, 0)),         # x
            # Constant-index weight block (fetched once by the pipeline).
            pl.BlockSpec((E, 3 * Dpad), lambda i, n_ref: (0, 0)),     # fused W
            pl.BlockSpec((rows, D), lambda i, n_ref: (i, 0)),         # bias_q
            pl.BlockSpec((rows, D), lambda i, n_ref: (i, 0)),         # bias_k
            pl.BlockSpec((rows, D), lambda i, n_ref: (i, 0)),         # bias_v
        ],
        out_specs=pl.BlockSpec((rows, Dpad), lambda i, n_ref: (i, 0)),
        scratch_shapes=[pltpu.VMEM((3, rows, Dpad), jnp.bfloat16)],
    )

    out_flat = pl.pallas_call(
        kernel,
        out_shape=jax.ShapeDtypeStruct((B * Sp, Dpad), jnp.bfloat16),
        grid_spec=grid_spec,
        compiler_params=pltpu.CompilerParams(
            dimension_semantics=("parallel",),
            vmem_limit_bytes=vmem_limit,
        ),
    )(n_arr, x_flat, w_pad, bq_flat, bk_flat, bv_flat)

    out = out_flat.reshape(B, Sp, Dpad)[:, :S, :D]
    return out.astype(jnp.float32)


def sdp_attn_ref(x, n, wq, wk, wv, bq, bk, bv, *, d_k, decoding):
    """Pure-JAX reference mirroring the kernel's bf16-operand / f32-accum math."""
    bf16, f32 = jnp.bfloat16, jnp.float32

    def proj(w, b):
        p = jnp.einsum("bse,ed->bsd", x.astype(bf16), w.astype(bf16),
                       preferred_element_type=f32)
        return (p + b.astype(bf16).astype(f32)).astype(bf16)

    q, k, v = proj(wq, bq), proj(wk, bk), proj(wv, bv)
    scores = jnp.einsum("bqd,bkd->bqk", q, k,
                        preferred_element_type=f32) / np.sqrt(d_k)
    S = x.shape[1]
    row = jnp.arange(S)[:, None]
    col = jnp.arange(S)[None, :]
    keep = (row < n) & (col < n)
    if decoding:
        keep = keep & (col <= row)
    scores = jnp.where(keep[None], scores, -1.0e9)
    p = jax.nn.softmax(scores, axis=-1)
    return jnp.einsum("bqk,bkd->bqd", p.astype(bf16), v,
                      preferred_element_type=f32)


if __name__ == "__main__":
    # Small shapes consistent with the module:
    #   d_embed=32, d_k=8, h1=4 -> d_model=32, seq_len=8 (x's seq must equal
    #   PadMasking's seq_len), batch=2, valid length n=6, decoding=True.
    B, S, E, d_k, h1 = 2, 8, 32, 8, 4
    D = d_k * h1
    decoding = True
    n = 6

    key = jax.random.PRNGKey(0)
    kx, kq, kk, kv, kbq, kbk, kbv = jax.random.split(key, 7)

    x = jax.random.normal(kx, (B, S, E), jnp.float32)
    wq = jax.random.normal(kq, (E, D), jnp.float32)
    wk = jax.random.normal(kk, (E, D), jnp.float32)
    wv = jax.random.normal(kv, (E, D), jnp.float32)
    # FCLayer draws torch.randn(x.size()) per call; made deterministic here.
    bq = jax.random.normal(kbq, (B, S, D), jnp.float32)
    bk = jax.random.normal(kbk, (B, S, D), jnp.float32)
    bv = jax.random.normal(kbv, (B, S, D), jnp.float32)

    out = sdp_attn(x, n, wq, wk, wv, bq, bk, bv, d_k=d_k, decoding=decoding)
    jax.block_until_ready(out)

    ref = sdp_attn_ref(x, n, wq, wk, wv, bq, bk, bv, d_k=d_k, decoding=decoding)
    np.testing.assert_allclose(np.asarray(out), np.asarray(ref),
                               rtol=5e-2, atol=1e-1)

    print("KERNEL_OK")
</pallas_src>

<mosaic_0001>
module attributes {stable_mosaic.version = 11 : i64} {
  func.func @_sdp_attn_kernel(%arg0: i32, %arg1: memref<1xi32, #tpu.memory_space<smem>>, %arg2: memref<8x32xbf16, #tpu.memory_space<vmem>>, %arg3: memref<32x384xbf16, #tpu.memory_space<vmem>>, %arg4: memref<8x32xbf16, #tpu.memory_space<vmem>>, %arg5: memref<8x32xbf16, #tpu.memory_space<vmem>>, %arg6: memref<8x32xbf16, #tpu.memory_space<vmem>>, %arg7: memref<8x128xbf16, #tpu.memory_space<vmem>>, %arg8: memref<3x8x128xbf16, #tpu.memory_space<vmem>>) attributes {dimension_semantics = [#tpu.dimension_semantics<parallel>], iteration_bounds = array<i64: 2>, scalar_prefetch = 1 : i64, scratch_operands = 1 : i64, tpu.core_type = #tpu.core_type<tc>, window_params = [{transform_indices = @transform_0, window_bounds = array<i64: 8, 32>}, {pipeline_mode = #tpu.pipeline_mode<synchronous>, transform_indices = @transform_1, window_bounds = array<i64: 32, 384>}, {transform_indices = @transform_2, window_bounds = array<i64: 8, 32>}, {transform_indices = @transform_3, window_bounds = array<i64: 8, 32>}, {transform_indices = @transform_4, window_bounds = array<i64: 8, 32>}, {transform_indices = @transform_5, window_bounds = array<i64: 8, 128>}]} {
    %c0 = arith.constant 0 : index
    %0 = memref.load %arg1[%c0] : memref<1xi32, #tpu.memory_space<smem>>
    %cst = arith.constant 0.000000e+00 : bf16
    %1 = vector.broadcast %cst : bf16 to vector<3x8x128xbf16>
    %c0_0 = arith.constant 0 : index
    %c0_1 = arith.constant 0 : index
    %c0_2 = arith.constant 0 : index
    %2 = vector.load %arg8[%c0_0, %c0_1, %c0_2] : memref<3x8x128xbf16, #tpu.memory_space<vmem>>, vector<3x8x128xbf16>
    tpu.vector_store %arg8[%c0_0, %c0_1, %c0_2], %1 {strides = array<i32>} : memref<3x8x128xbf16, #tpu.memory_space<vmem>>, vector<3x8x128xbf16>,
    %c0_3 = arith.constant 0 : index
    %c0_4 = arith.constant 0 : index
    %3 = vector.load %arg2[%c0_3, %c0_4] : memref<8x32xbf16, #tpu.memory_space<vmem>>, vector<8x32xbf16>
    %c0_5 = arith.constant 0 : index
    %c0_6 = arith.constant 0 : index
    %4 = vector.load %arg3[%c0_5, %c0_6] : memref<32x384xbf16, #tpu.memory_space<vmem>>, vector<32x384xbf16>
    %cst_7 = arith.constant dense<0.000000e+00> : vector<8x384xf32>
    %5 = tpu.matmul %3, %4, %cst_7 {dimension_numbers = #tpu.dot_dimension_numbers<[1], [0], [0], [1], [0, 0, 1, 1], [], []>} : vector<8x32xbf16>, vector<32x384xbf16>, vector<8x384xf32> -> vector<8x384xf32>
    %6 = vector.extract_strided_slice %5 {offsets = [0, 0], sizes = [8, 32], strides = [1, 1]} : vector<8x384xf32> to vector<8x32xf32>
    %c0_8 = arith.constant 0 : index
    %c0_9 = arith.constant 0 : index
    %7 = vector.load %arg4[%c0_8, %c0_9] : memref<8x32xbf16, #tpu.memory_space<vmem>>, vector<8x32xbf16>
    %8 = arith.extf %7 : vector<8x32xbf16> to vector<8x32xf32>
    %9 = arith.addf %6, %8 : vector<8x32xf32>
    %10 = arith.truncf %9 : vector<8x32xf32> to vector<8x32xbf16>
    %c0_10 = arith.constant 0 : index
    %c0_11 = arith.constant 0 : index
    %c0_12 = arith.constant 0 : index
    %11 = vector.load %arg8[%c0_10, %c0_11, %c0_12] : memref<3x8x128xbf16, #tpu.memory_space<vmem>>, vector<1x8x32xbf16>
    %12 = vector.shape_cast %11 : vector<1x8x32xbf16> to vector<8x32xbf16>
    %13 = vector.shape_cast %10 : vector<8x32xbf16> to vector<1x8x32xbf16>
    tpu.vector_store %arg8[%c0_10, %c0_11, %c0_12], %13 {strides = array<i32>} : memref<3x8x128xbf16, #tpu.memory_space<vmem>>, vector<1x8x32xbf16>,
    %14 = vector.extract_strided_slice %5 {offsets = [0, 128], sizes = [8, 32], strides = [1, 1]} : vector<8x384xf32> to vector<8x32xf32>
    %c0_13 = arith.constant 0 : index
    %c0_14 = arith.constant 0 : index
    %15 = vector.load %arg5[%c0_13, %c0_14] : memref<8x32xbf16, #tpu.memory_space<vmem>>, vector<8x32xbf16>
    %16 = arith.extf %15 : vector<8x32xbf16> to vector<8x32xf32>
    %17 = arith.addf %14, %16 : vector<8x32xf32>
    %18 = arith.truncf %17 : vector<8x32xf32> to vector<8x32xbf16>
    %c1 = arith.constant 1 : index
    %c0_15 = arith.constant 0 : index
    %c0_16 = arith.constant 0 : index
    %19 = vector.load %arg8[%c1, %c0_15, %c0_16] : memref<3x8x128xbf16, #tpu.memory_space<vmem>>, vector<1x8x32xbf16>
    %20 = vector.shape_cast %19 : vector<1x8x32xbf16> to vector<8x32xbf16>
    %21 = vector.shape_cast %18 : vector<8x32xbf16> to vector<1x8x32xbf16>
    tpu.vector_store %arg8[%c1, %c0_15, %c0_16], %21 {strides = array<i32>} : memref<3x8x128xbf16, #tpu.memory_space<vmem>>, vector<1x8x32xbf16>,
    %22 = vector.extract_strided_slice %5 {offsets = [0, 256], sizes = [8, 32], strides = [1, 1]} : vector<8x384xf32> to vector<8x32xf32>
    %c0_17 = arith.constant 0 : index
    %c0_18 = arith.constant 0 : index
    %23 = vector.load %arg6[%c0_17, %c0_18] : memref<8x32xbf16, #tpu.memory_space<vmem>>, vector<8x32xbf16>
    %24 = arith.extf %23 : vector<8x32xbf16> to vector<8x32xf32>
    %25 = arith.addf %22, %24 : vector<8x32xf32>
    %26 = arith.truncf %25 : vector<8x32xf32> to vector<8x32xbf16>
    %c2 = arith.constant 2 : index
    %c0_19 = arith.constant 0 : index
    %c0_20 = arith.constant 0 : index
    %27 = vector.load %arg8[%c2, %c0_19, %c0_20] : memref<3x8x128xbf16, #tpu.memory_space<vmem>>, vector<1x8x32xbf16>
    %28 = vector.shape_cast %27 : vector<1x8x32xbf16> to vector<8x32xbf16>
    %29 = vector.shape_cast %26 : vector<8x32xbf16> to vector<1x8x32xbf16>
    tpu.vector_store %arg8[%c2, %c0_19, %c0_20], %29 {strides = array<i32>} : memref<3x8x128xbf16, #tpu.memory_space<vmem>>, vector<1x8x32xbf16>,
    %30 = tpu.iota {dimensions = array<i32: 1>} : vector<1x8xi32>
    %31 = tpu.iota {dimensions = array<i32: 0>} : vector<8x1xi32>
    %32 = vector.broadcast %30 : vector<1x8xi32> to vector<8x8xi32>
    %33 = vector.broadcast %31 : vector<8x1xi32> to vector<8x8xi32>
    %34 = arith.maxsi %32, %33 : vector<8x8xi32>
    %35 = vector.broadcast %0 : i32 to vector<8x8xi32>
    %36 = arith.cmpi slt, %34, %35 : vector<8x8xi32>
    %37 = vector.broadcast %30 : vector<1x8xi32> to vector<8x8xi32>
    %38 = vector.broadcast %31 : vector<8x1xi32> to vector<8x8xi32>
    %39 = arith.cmpi sle, %37, %38 : vector<8x8xi32>
    %40 = arith.andi %36, %39 : vector<8x8xi1>
    %cst_21 = arith.constant 0.353553385 : f32
    %cst_22 = arith.constant -1.000000e+09 : f32
    %c0_i32 = arith.constant 0 : i32
    %c8_i32 = arith.constant 8 : i32
    %41 = arith.muli %c0_i32, %c8_i32 : i32
    %42 = tpu.assume_multiple %41, 8 : i32
    %c0_23 = arith.constant 0 : index
    %43 = arith.index_cast %42 : i32 to index
    %c0_24 = arith.constant 0 : index
    %44 = vector.load %arg8[%c0_23, %43, %c0_24] : memref<3x8x128xbf16, #tpu.memory_space<vmem>>, vector<1x8x128xbf16>
    %45 = vector.shape_cast %44 : vector<1x8x128xbf16> to vector<8x128xbf16>
    %c1_25 = arith.constant 1 : index
    %46 = arith.index_cast %42 : i32 to index
    %c0_26 = arith.constant 0 : index
    %47 = vector.load %arg8[%c1_25, %46, %c0_26] : memref<3x8x128xbf16, #tpu.memory_space<vmem>>, vector<1x8x128xbf16>
    %48 = vector.shape_cast %47 : vector<1x8x128xbf16> to vector<8x128xbf16>
    %c2_27 = arith.constant 2 : index
    %49 = arith.index_cast %42 : i32 to index
    %c0_28 = arith.constant 0 : index
    %50 = vector.load %arg8[%c2_27, %49, %c0_28] : memref<3x8x128xbf16, #tpu.memory_space<vmem>>, vector<1x8x128xbf16>
    %51 = vector.shape_cast %50 : vector<1x8x128xbf16> to vector<8x128xbf16>
    %cst_29 = arith.constant dense<0.000000e+00> : vector<8x8xf32>
    %52 = tpu.matmul %45, %48, %cst_29 {dimension_numbers = #tpu.dot_dimension_numbers<[1], [1], [0], [0], [0, 0, 1, 0], [], []>} : vector<8x128xbf16>, vector<8x128xbf16>, vector<8x8xf32> -> vector<8x8xf32>
    %53 = vector.broadcast %cst_21 : f32 to vector<8x8xf32>
    %54 = arith.mulf %52, %53 : vector<8x8xf32>
    %55 = vector.broadcast %cst_22 : f32 to vector<8x8xf32>
    %56 = arith.select %40, %54, %55 : vector<8x8xi1>, vector<8x8xf32>
    %cst_30 = arith.constant dense<0xFF800000> : vector<8xf32>
    %57 = vector.multi_reduction <maximumf>, %56, %cst_30 [1] : vector<8x8xf32> to vector<8xf32>
    %58 = vector.shape_cast %57 : vector<8xf32> to vector<8x1xf32>
    %59 = vector.broadcast %58 : vector<8x1xf32> to vector<8x8xf32>
    %60 = arith.subf %56, %59 : vector<8x8xf32>
    %61 = math.exp %60 : vector<8x8xf32>
    %cst_31 = arith.constant dense<0.000000e+00> : vector<8xf32>
    %62 = vector.multi_reduction <add>, %61, %cst_31 [1] : vector<8x8xf32> to vector<8xf32>
    %63 = vector.shape_cast %62 : vector<8xf32> to vector<8x1xf32>
    %64 = tpu.reciprocal %63 {approx = true} : vector<8x1xf32> -> vector<8x1xf32>
    %65 = vector.broadcast %64 : vector<8x1xf32> to vector<8x8xf32>
    %66 = arith.mulf %61, %65 : vector<8x8xf32>
    %67 = arith.truncf %66 : vector<8x8xf32> to vector<8x8xbf16>
    %cst_32 = arith.constant dense<0.000000e+00> : vector<8x128xf32>
    %68 = tpu.matmul %67, %51, %cst_32 {dimension_numbers = #tpu.dot_dimension_numbers<[1], [0], [0], [1], [0, 0, 1, 1], [], []>} : vector<8x8xbf16>, vector<8x128xbf16>, vector<8x128xf32> -> vector<8x128xf32>
    %69 = arith.truncf %68 : vector<8x128xf32> to vector<8x128xbf16>
    %70 = arith.index_cast %42 : i32 to index
    %c0_33 = arith.constant 0 : index
    %71 = vector.load %arg7[%70, %c0_33] : memref<8x128xbf16, #tpu.memory_space<vmem>>, vector<8x128xbf16>
    tpu.vector_store %arg7[%70, %c0_33], %69 {strides = array<i32>} : memref<8x128xbf16, #tpu.memory_space<vmem>>, vector<8x128xbf16>,
    %c1_i32 = arith.constant 1 : i32
    return
  }
  func.func @transform_0(%arg0: i32, %arg1: memref<1xi32, #tpu.memory_space<smem>>) -> (i32, i32) {
    %c0_i32 = arith.constant 0 : i32
    %c0_i32_0 = arith.constant 0 : i32
    return %arg0, %c0_i32 : i32, i32
  }
  func.func @transform_1(%arg0: i32, %arg1: memref<1xi32, #tpu.memory_space<smem>>) -> (i32, i32) {
    %c0_i32 = arith.constant 0 : i32
    %c0_i32_0 = arith.constant 0 : i32
    %c0_i32_1 = arith.constant 0 : i32
    return %c0_i32, %c0_i32_0 : i32, i32
  }
  func.func @transform_2(%arg0: i32, %arg1: memref<1xi32, #tpu.memory_space<smem>>) -> (i32, i32) {
    %c0_i32 = arith.constant 0 : i32
    %c0_i32_0 = arith.constant 0 : i32
    return %arg0, %c0_i32 : i32, i32
  }
  func.func @transform_3(%arg0: i32, %arg1: memref<1xi32, #tpu.memory_space<smem>>) -> (i32, i32) {
    %c0_i32 = arith.constant 0 : i32
    %c0_i32_0 = arith.constant 0 : i32
    return %arg0, %c0_i32 : i32, i32
  }
  func.func @transform_4(%arg0: i32, %arg1: memref<1xi32, #tpu.memory_space<smem>>) -> (i32, i32) {
    %c0_i32 = arith.constant 0 : i32
    %c0_i32_0 = arith.constant 0 : i32
    return %arg0, %c0_i32 : i32, i32
  }
  func.func @transform_5(%arg0: i32, %arg1: memref<1xi32, #tpu.memory_space<smem>>) -> (i32, i32) {
    %c0_i32 = arith.constant 0 : i32
    %c0_i32_0 = arith.constant 0 : i32
    return %arg0, %c0_i32 : i32, i32
  }
}

</mosaic_0001>

<llo_original>
// kernel: tpu_custom_call.1
$region0: #{tpu_custom_call.1}
  #allocation0 [shape = 'u32[]', space=smem, size = 0x4, offset = 0x4, fixed_abs, tag = 'smem constant byte address 0x4 - core index']
  #allocation1 [shape = 'u32[72,128]{1,0:T(1,128)}', space=vmem, size = 0x9000, scoped, tag = 'internal scratch']
  #allocation2 [shape = 'bf16[3,8,128]{2,1,0:T(8,128)(2,1)}', space=vmem, size = 0x1800, scoped, tag = 'scratch operand']
  #allocation3 [shape = 's32[1]{0}', space=sflag, size = 0x4, scoped, tag = 'scoped memory for tpu_custom_call.1']
  #allocation4 [shape = 's32[1]{0:T(128)S(6)}', space=smem, size = 0x200, scoped, tag = 'prefetched SMEM operand 0']
  %s0 = inlined_call_operand.<no memory space> [shape: s32[1], index: 0, kind: input, shape index: {}]
  %s1 = inlined_call_operand.hbm [shape: bf16[16,32], index: 1, kind: input, shape index: {}]
  %s2 = inlined_call_operand.hbm [shape: bf16[32,384], index: 2, kind: input, shape index: {}]
  %s3 = inlined_call_operand.hbm [shape: bf16[16,32], index: 3, kind: input, shape index: {}]
  %s4 = inlined_call_operand.hbm [shape: bf16[16,32], index: 4, kind: input, shape index: {}]
  %s5 = inlined_call_operand.hbm [shape: bf16[16,32], index: 5, kind: input, shape index: {}]
  %s6 = inlined_call_operand.hbm [shape: bf16[16,128], index: 6, kind: output, shape index: {}]
  %s7 = sld [smem:[#allocation0]]
  $region73: #{tpu_custom_call.1} parent=0
    _
  %s9 = ssub.s32 1, %s7
  %s10 = scalar_select 0, %s9, %s7
  %11 = sst [smem:[#allocation4]] %s0
  $region1: #{tpu_custom_call.1} parent=0
    #allocation5 [shape = 'u8[4096]{0}', space=vmem, size = 0x1000, scoped, tag = 'input window, operand 1']
    #allocation6 [shape = 's32[2]{0}', space=sflag, size = 0x8, scoped, tag = 'scoped memory for tpu_custom_call.1']
    #allocation7 [shape = 's32[2]{0}', space=sflag, size = 0x8, scoped, tag = 'scoped memory for tpu_custom_call.1']
    #allocation8 [shape = 'u8[24576]{0}', space=vmem, size = 0x6000, scoped, tag = 'input window, operand 2, single buffered']
    #allocation9 [shape = 's32[1]{0}', space=sflag, size = 0x4, scoped, tag = 'scoped memory for tpu_custom_call.1']
    #allocation10 [shape = 'u8[4096]{0}', space=vmem, size = 0x1000, scoped, tag = 'input window, operand 3']
    #allocation11 [shape = 'u8[4096]{0}', space=vmem, size = 0x1000, scoped, tag = 'input window, operand 4']
    #allocation12 [shape = 'u8[4096]{0}', space=vmem, size = 0x1000, scoped, tag = 'input window, operand 5']
    #allocation13 [shape = 'u8[4096]{0}', space=vmem, size = 0x1000, scoped, tag = 'output window, operand 0']
    %12 = vsyncpa [#allocation6], 0
    %s13 = scalar_lea.sflag [#allocation6], 1
    %14 = vsyncpa %s13, 0
    %15 = vsyncpa [#allocation9], 0
    %16 = vsyncpa [#allocation7], 0
    %s17 = scalar_lea.sflag [#allocation7], 1
    %18 = vsyncpa %s17, 0
    loop: start=0, step=1, limit=4
    $region2: #{tpu_custom_call.1} parent=1 // loop_pre_header
      _
    $region3: #{tpu_custom_call.1} parent=1 // loop_header
      %s20 = sphi 0, %s24
      %p21 = scmp.ge.s32.totalorder %s20, 4
      %s30 = sphi 0, %s32
      %s33 = sphi 0, %s30
      %s34 = sphi 0, %s33
      %s50 = sphi 0, %s34
      %s54 = sphi 0, %s54
      %s56 = sphi 0, %s54
      %s57 = sphi 0, %s56
      %s71 = sphi 0, %s57
      %s77 = sphi 0, %s79
      %s80 = sphi 0, %s77
      %s81 = sphi 0, %s80
      %s97 = sphi 0, %s81
      %s103 = sphi 0, %s105
      %s106 = sphi 0, %s103
      %s107 = sphi 0, %s106
      %s123 = sphi 0, %s107
      %s129 = sphi 0, %s131
      %s132 = sphi 0, %s129
      %s133 = sphi 0, %s132
      %s149 = sphi 0, %s133
      %s155 = sphi 0, %s157
      %s158 = sphi 0, %s155
      %s159 = sphi 0, %s158
      %s175 = sphi 0, %s159
    $region4: #{tpu_custom_call.1} parent=1 // loop_header_branch
      %23 = sbr.rel (%p21) target = $region8
    $region5: #{tpu_custom_call.1} parent=1 // loop_body
      %s25 = ssub.s32 %s20, 1
      %s26 = ssub.s32 %s20, 2
      %s27 = sadd.s32 %s20, 1
      %s28 = ssub.s32 %s20, %s27
      %p29 = scmp.eq.s32.totalorder %s28, 0
      %s31 = sadd.s32 %s30, 1
      %s32 = scalar_select %p29, %s30, %s31
      %p35 = pneg %p29
      %p36 = scmp.eq.s32.totalorder %s20, 1
      %p37 = por %p35, %p36
      %p38 = scmp.ne.s32.totalorder %s30, %s33
      %p39 = scmp.eq.s32.totalorder %s20, 0
      %p40 = por %p38, %p39
      %p41 = scmp.ne.s32.totalorder %s30, %s33
      %p42 = scmp.eq.s32.totalorder %s25, 1
      %p43 = por %p41, %p42
      %p44 = scmp.ne.s32.totalorder %s33, %s34
      %p45 = scmp.eq.s32.totalorder %s25, 0
      %p46 = por %p44, %p45
      %p47 = scmp.ne.s32.totalorder %s33, %s34
      %p48 = scmp.eq.s32.totalorder %s26, 1
      %p49 = por %p47, %p48
      %p51 = scmp.ne.s32.totalorder %s34, %s50
      %p52 = scmp.eq.s32.totalorder %s26, 0
      %p53 = por %p51, %p52
      %s55 = sadd.s32 %s54, 1
      %p58 = scmp.eq.s32.totalorder %s20, 1
      %p59 = scmp.ne.s32.totalorder %s54, %s56
      %p60 = scmp.eq.s32.totalorder %s20, 0
      %p61 = por %p59, %p60
      %p62 = scmp.ne.s32.totalorder %s54, %s56
      %p63 = scmp.eq.s32.totalorder %s25, 1
      %p64 = por %p62, %p63
      %p65 = scmp.ne.s32.totalorder %s56, %s57
      %p66 = scmp.eq.s32.totalorder %s25, 0
      %p67 = por %p65, %p66
      %p68 = scmp.ne.s32.totalorder %s56, %s57
      %p69 = scmp.eq.s32.totalorder %s26, 1
      %p70 = por %p68, %p69
      %p72 = scmp.ne.s32.totalorder %s57, %s71
      %p73 = scmp.eq.s32.totalorder %s26, 0
      %p74 = por %p72, %p73
      %s75 = ssub.s32 %s20, %s27
      %p76 = scmp.eq.s32.totalorder %s75, 0
      %s78 = sadd.s32 %s77, 1
      %s79 = scalar_select %p76, %s77, %s78
      %p82 = pneg %p76
      %p83 = scmp.eq.s32.totalorder %s20, 1
      %p84 = por %p82, %p83
      %p85 = scmp.ne.s32.totalorder %s77, %s80
      %p86 = scmp.eq.s32.totalorder %s20, 0
      %p87 = por %p85, %p86
      %p88 = scmp.ne.s32.totalorder %s77, %s80
      %p89 = scmp.eq.s32.totalorder %s25, 1
      %p90 = por %p88, %p89
      %p91 = scmp.ne.s32.totalorder %s80, %s81
      %p92 = scmp.eq.s32.totalorder %s25, 0
      %p93 = por %p91, %p92
      %p94 = scmp.ne.s32.totalorder %s80, %s81
      %p95 = scmp.eq.s32.totalorder %s26, 1
      %p96 = por %p94, %p95
      %p98 = scmp.ne.s32.totalorder %s81, %s97
      %p99 = scmp.eq.s32.totalorder %s26, 0
      %p100 = por %p98, %p99
      %s101 = ssub.s32 %s20, %s27
      %p102 = scmp.eq.s32.totalorder %s101, 0
      %s104 = sadd.s32 %s103, 1
      %s105 = scalar_select %p102, %s103, %s104
      %p108 = pneg %p102
      %p109 = scmp.eq.s32.totalorder %s20, 1
      %p110 = por %p108, %p109
      %p111 = scmp.ne.s32.totalorder %s103, %s106
      %p112 = scmp.eq.s32.totalorder %s20, 0
      %p113 = por %p111, %p112
      %p114 = scmp.ne.s32.totalorder %s103, %s106
      %p115 = scmp.eq.s32.totalorder %s25, 1
      %p116 = por %p114, %p115
      %p117 = scmp.ne.s32.totalorder %s106, %s107
      %p118 = scmp.eq.s32.totalorder %s25, 0
      %p119 = por %p117, %p118
      %p120 = scmp.ne.s32.totalorder %s106, %s107
      %p121 = scmp.eq.s32.totalorder %s26, 1
      %p122 = por %p120, %p121
      %p124 = scmp.ne.s32.totalorder %s107, %s123
      %p125 = scmp.eq.s32.totalorder %s26, 0
      %p126 = por %p124, %p125
      %s127 = ssub.s32 %s20, %s27
      %p128 = scmp.eq.s32.totalorder %s127, 0
      %s130 = sadd.s32 %s129, 1
      %s131 = scalar_select %p128, %s129, %s130
      %p134 = pneg %p128
      %p135 = scmp.eq.s32.totalorder %s20, 1
      %p136 = por %p134, %p135
      %p137 = scmp.ne.s32.totalorder %s129, %s132
      %p138 = scmp.eq.s32.totalorder %s20, 0
      %p139 = por %p137, %p138
      %p140 = scmp.ne.s32.totalorder %s129, %s132
      %p141 = scmp.eq.s32.totalorder %s25, 1
      %p142 = por %p140, %p141
      %p143 = scmp.ne.s32.totalorder %s132, %s133
      %p144 = scmp.eq.s32.totalorder %s25, 0
      %p145 = por %p143, %p144
      %p146 = scmp.ne.s32.totalorder %s132, %s133
      %p147 = scmp.eq.s32.totalorder %s26, 1
      %p148 = por %p146, %p147
      %p150 = scmp.ne.s32.totalorder %s133, %s149
      %p151 = scmp.eq.s32.totalorder %s26, 0
      %p152 = por %p150, %p151
      %s153 = ssub.s32 %s20, %s27
      %p154 = scmp.eq.s32.totalorder %s153, 0
      %s156 = sadd.s32 %s155, 1
      %s157 = scalar_select %p154, %s155, %s156
      %p160 = pneg %p154
      %p161 = scmp.eq.s32.totalorder %s20, 1
      %p162 = por %p160, %p161
      %p163 = scmp.ne.s32.totalorder %s155, %s158
      %p164 = scmp.eq.s32.totalorder %s20, 0
      %p165 = por %p163, %p164
      %p166 = scmp.ne.s32.totalorder %s155, %s158
      %p167 = scmp.eq.s32.totalorder %s25, 1
      %p168 = por %p166, %p167
      %p169 = scmp.ne.s32.totalorder %s158, %s159
      %p170 = scmp.eq.s32.totalorder %s25, 0
      %p171 = por %p169, %p170
      %p172 = scmp.ne.s32.totalorder %s158, %s159
      %p173 = scmp.eq.s32.totalorder %s26, 1
      %p174 = por %p172, %p173
      %p176 = scmp.ne.s32.totalorder %s159, %s175
      %p177 = scmp.eq.s32.totalorder %s26, 0
      %p178 = por %p176, %p177
      %p179 = scmp.le.s32.totalorder 1, %s20
      %p180 = scmp.lt.s32.totalorder %s20, 3
      %p181 = pnand %p179, %p180
      %p182 = pneg %p181
      // Predicated region
      $region9: #{tpu_custom_call.1} parent=5 // pred_check
        _
      $region10: #{tpu_custom_call.1} parent=5 // pred_check_branch
        %184 = sbr.rel (%p181) target = $region12
      $region11: #{tpu_custom_call.1} parent=5 // pred_region
        %s185 = ssub.s32 %s20, 1
        // Predicated region
        $region13: #{tpu_custom_call.1} parent=11 // pred_check
          %p186 = pneg %p67
        $region14: #{tpu_custom_call.1} parent=11 // pred_check_branch
          %188 = sbr.rel (%p186) target = $region16
        $region15: #{tpu_custom_call.1} parent=11 // pred_region
          %190 = vsyncadd [#allocation9], 0
          %s191 = sshll.u32 %s2, 4
          %s192 = int_to_ptr.hbm [resolvable:$true] %s191
          %s193 = sshll.u32 [#allocation8], 4
          %s194 = int_to_ptr.vmem [resolvable:$true] %s193
          %199 = dma.hbm_to_vmem [thread:$0]  %s192, 768, %s194, [#allocation9], 192, 192, 12
        $region16: #{tpu_custom_call.1} parent=11 // pred_fallthru
          _
      $region12: #{tpu_custom_call.1} parent=5 // pred_fallthru
        _
      %p200 = scmp.lt.s32.totalorder %s20, 2
      // Predicated region
      $region17: #{tpu_custom_call.1} parent=5 // pred_check
        %p201 = pneg %p200
      $region18: #{tpu_custom_call.1} parent=5 // pred_check_branch
        %203 = sbr.rel (%p201) target = $region20
      $region19: #{tpu_custom_call.1} parent=5 // pred_region
        // Predicated region
        $region21: #{tpu_custom_call.1} parent=19 // pred_check
          %p204 = pneg %p40
        $region22: #{tpu_custom_call.1} parent=19 // pred_check_branch
          %206 = sbr.rel (%p204) target = $region24
        $region23: #{tpu_custom_call.1} parent=19 // pred_region
          %s207 = sand.u32 %s20, 1
          %s208 = scalar_lea.sflag [#allocation6], %s207
          %s209 = sand.u32 %s30, 1
          %s210 = smul.addr %s209, 4
          %s211 = scalar_lea.vmem [#allocation5], %s210
          %213 = vsyncadd %s208, 0
          %s214 = smul.addr %s20, 4
          %s215 = scalar_lea.hbm %s1, %s214
          %s217 = sshll.u32 %s215, 4
          %s218 = int_to_ptr.hbm [resolvable:$true] %s217
          %s219 = sshll.u32 %s211, 4
          %s220 = int_to_ptr.vmem [resolvable:$true] %s219
          %222 = dma.hbm_to_vmem [thread:$0]  %s218, 64, %s220, %s208
        $region24: #{tpu_custom_call.1} parent=19 // pred_fallthru
          _
        // Predicated region
        $region25: #{tpu_custom_call.1} parent=19 // pred_check
          %p223 = pneg %p87
        $region26: #{tpu_custom_call.1} parent=19 // pred_check_branch
          %225 = sbr.rel (%p223) target = $region28
        $region27: #{tpu_custom_call.1} parent=19 // pred_region
          %s226 = sand.u32 %s20, 1
          %s227 = scalar_lea.sflag [#allocation6], %s226
          %s228 = sand.u32 %s77, 1
          %s229 = smul.addr %s228, 4
          %s230 = scalar_lea.vmem [#allocation10], %s229
          %232 = vsyncadd %s227, 0
          %s233 = smul.addr %s20, 4
          %s234 = scalar_lea.hbm %s3, %s233
          %s236 = sshll.u32 %s234, 4
          %s237 = int_to_ptr.hbm [resolvable:$true] %s236
          %s238 = sshll.u32 %s230, 4
          %s239 = int_to_ptr.vmem [resolvable:$true] %s238
          %241 = dma.hbm_to_vmem [thread:$0]  %s237, 64, %s239, %s227
        $region28: #{tpu_custom_call.1} parent=19 // pred_fallthru
          _
        // Predicated region
        $region29: #{tpu_custom_call.1} parent=19 // pred_check
          %p242 = pneg %p113
        $region30: #{tpu_custom_call.1} parent=19 // pred_check_branch
          %244 = sbr.rel (%p242) target = $region32
        $region31: #{tpu_custom_call.1} parent=19 // pred_region
          %s245 = sand.u32 %s20, 1
          %s246 = scalar_lea.sflag [#allocation6], %s245
          %s247 = sand.u32 %s103, 1
          %s248 = smul.addr %s247, 4
          %s249 = scalar_lea.vmem [#allocation11], %s248
          %251 = vsyncadd %s246, 0
          %s252 = smul.addr %s20, 4
          %s253 = scalar_lea.hbm %s4, %s252
          %s255 = sshll.u32 %s253, 4
          %s256 = int_to_ptr.hbm [resolvable:$true] %s255
          %s257 = sshll.u32 %s249, 4
          %s258 = int_to_ptr.vmem [resolvable:$true] %s257
          %260 = dma.hbm_to_vmem [thread:$0]  %s256, 64, %s258, %s246
        $region32: #{tpu_custom_call.1} parent=19 // pred_fallthru
          _
        // Predicated region
        $region33: #{tpu_custom_call.1} parent=19 // pred_check
          %p261 = pneg %p139
        $region34: #{tpu_custom_call.1} parent=19 // pred_check_branch
          %263 = sbr.rel (%p261) target = $region36
        $region35: #{tpu_custom_call.1} parent=19 // pred_region
          %s264 = sand.u32 %s20, 1
          %s265 = scalar_lea.sflag [#allocation6], %s264
          %s266 = sand.u32 %s129, 1
          %s267 = smul.addr %s266, 4
          %s268 = scalar_lea.vmem [#allocation12], %s267
          %270 = vsyncadd %s265, 0
          %s271 = smul.addr %s20, 4
          %s272 = scalar_lea.hbm %s5, %s271
          %s274 = sshll.u32 %s272, 4
          %s275 = int_to_ptr.hbm [resolvable:$true] %s274
          %s276 = sshll.u32 %s268, 4
          %s277 = int_to_ptr.vmem [resolvable:$true] %s276
          %279 = dma.hbm_to_vmem [thread:$0]  %s275, 64, %s277, %s265
        $region36: #{tpu_custom_call.1} parent=19 // pred_fallthru
          _
      $region20: #{tpu_custom_call.1} parent=5 // pred_fallthru
        _
      %p280 = scmp.le.s32.totalorder 1, %s20
      %p281 = scmp.lt.s32.totalorder %s20, 3
      %p282 = pnand %p280, %p281
      %p283 = pneg %p282
      // Predicated region
      $region37: #{tpu_custom_call.1} parent=5 // pred_check
        _
      $region38: #{tpu_custom_call.1} parent=5 // pred_check_branch
        %285 = sbr.rel (%p282) target = $region40
      $region39: #{tpu_custom_call.1} parent=5 // pred_region
        %s286 = ssub.s32 %s20, 1
        %s287 = sand.u32 %s25, 1
        %s288 = scalar_lea.sflag [#allocation6], %s287
        %s289 = sand.u32 %s33, 1
        %s290 = smul.addr %s289, 4
        %s291 = scalar_lea.vmem [#allocation5], %s290
        // Predicated region
        $region41: #{tpu_custom_call.1} parent=39 // pred_check
          %p292 = pneg %p46
        $region42: #{tpu_custom_call.1} parent=39 // pred_check_branch
          %294 = sbr.rel (%p292) target = $region44
        $region43: #{tpu_custom_call.1} parent=39 // pred_region
          %296 = dma.done %s288, 64
        $region44: #{tpu_custom_call.1} parent=39 // pred_fallthru
          _
        // Predicated region
        $region45: #{tpu_custom_call.1} parent=39 // pred_check
          %p297 = pneg %p67
        $region46: #{tpu_custom_call.1} parent=39 // pred_check_branch
          %299 = sbr.rel (%p297) target = $region48
        $region47: #{tpu_custom_call.1} parent=39 // pred_region
          %301 = dma.done [#allocation9], 768
        $region48: #{tpu_custom_call.1} parent=39 // pred_fallthru
          _
        %s302 = sand.u32 %s25, 1
        %s303 = scalar_lea.sflag [#allocation6], %s302
        %s304 = sand.u32 %s80, 1
        %s305 = smul.addr %s304, 4
        %s306 = scalar_lea.vmem [#allocation10], %s305
        // Predicated region
        $region49: #{tpu_custom_call.1} parent=39 // pred_check
          %p307 = pneg %p93
        $region50: #{tpu_custom_call.1} parent=39 // pred_check_branch
          %309 = sbr.rel (%p307) target = $region52
        $region51: #{tpu_custom_call.1} parent=39 // pred_region
          %311 = dma.done %s303, 64
        $region52: #{tpu_custom_call.1} parent=39 // pred_fallthru
          _
        %s312 = sand.u32 %s25, 1
        %s313 = scalar_lea.sflag [#allocation6], %s312
        %s314 = sand.u32 %s106, 1
        %s315 = smul.addr %s314, 4
        %s316 = scalar_lea.vmem [#allocation11], %s315
        // Predicated region
        $region53: #{tpu_custom_call.1} parent=39 // pred_check
          %p317 = pneg %p119
        $region54: #{tpu_custom_call.1} parent=39 // pred_check_branch
          %319 = sbr.rel (%p317) target = $region56
        $region55: #{tpu_custom_call.1} parent=39 // pred_region
          %321 = dma.done %s313, 64
        $region56: #{tpu_custom_call.1} parent=39 // pred_fallthru
          _
        %s322 = sand.u32 %s25, 1
        %s323 = scalar_lea.sflag [#allocation6], %s322
        %s324 = sand.u32 %s132, 1
        %s325 = smul.addr %s324, 4
        %s326 = scalar_lea.vmem [#allocation12], %s325
        // Predicated region
        $region57: #{tpu_custom_call.1} parent=39 // pred_check
          %p327 = pneg %p145
        $region58: #{tpu_custom_call.1} parent=39 // pred_check_branch
          %329 = sbr.rel (%p327) target = $region60
        $region59: #{tpu_custom_call.1} parent=39 // pred_region
          %331 = dma.done %s323, 64
        $region60: #{tpu_custom_call.1} parent=39 // pred_fallthru
          _
        %s332 = sand.u32 %s25, 1
        %s333 = scalar_lea.sflag [#allocation6], %s332
        %s334 = sand.u32 %s33, 1
        %s335 = smul.addr %s334, 4
        %s336 = scalar_lea.vmem [#allocation5], %s335
        %p337 = pneg %p46
        %p338 = pneg %p43
        %p339 = pneg %p67
        %p340 = pneg %p64
        %s341 = sand.u32 %s25, 1
        %s342 = scalar_lea.sflag [#allocation6], %s341
        %s343 = sand.u32 %s80, 1
        %s344 = smul.addr %s343, 4
        %s345 = scalar_lea.vmem [#allocation10], %s344
        %p346 = pneg %p93
        %p347 = pneg %p90
        %s348 = sand.u32 %s25, 1
        %s349 = scalar_lea.sflag [#allocation6], %s348
        %s350 = sand.u32 %s106, 1
        %s351 = smul.addr %s350, 4
        %s352 = scalar_lea.vmem [#allocation11], %s351
        %p353 = pneg %p119
        %p354 = pneg %p116
        %s355 = sand.u32 %s25, 1
        %s356 = scalar_lea.sflag [#allocation6], %s355
        %s357 = sand.u32 %s132, 1
        %s358 = smul.addr %s357, 4
        %s359 = scalar_lea.vmem [#allocation12], %s358
        %p360 = pneg %p145
        %p361 = pneg %p142
        %p362 = pneg %p171
        %p363 = pneg %p168
        %s364 = sand.u32 %s158, 1
        %s365 = scalar_lea.sflag [#allocation7], %s364
        %s366 = sand.u32 %s158, 1
        %s367 = smul.addr %s366, 4
        %s368 = scalar_lea.vmem [#allocation13], %s367
        %s370 = sld [smem:[#allocation4]]
        %371 = vst [vmem:[#allocation2] sm:$0xf] 0
        %372 = vst [vmem:[#allocation2 + $0x4] sm:$0xf] 0
        %373 = vst [vmem:[#allocation2 + $0x8] sm:$0xf] 0
        %v374 = vld [vmem:[%s291] sm:$0xf]
        %v375 = vld [vmem:[#allocation8] sm:$0xff]
        %v376 = vld [vmem:[#allocation8 + $0x8] sm:$0xf]
        %v377 = vld [vmem:[#allocation8 + $0xc] sm:$0xff]
        %v378 = vld [vmem:[#allocation8 + $0x14] sm:$0xf]
        %v379 = vld [vmem:[#allocation8 + $0x18] sm:$0xff]
        %v380 = vld [vmem:[#allocation8 + $0x20] sm:$0xf]
        %v381 = vld [vmem:[#allocation8 + $0x24] sm:$0xff]
        %v382 = vld [vmem:[#allocation8 + $0x2c] sm:$0xf]
        %v391 = vunpack.c.l.b16 %v375
        %v392 = vunpack.c.h.b16 %v375
        %v393 = vunpack.c.l.b16 %v376
        %v394 = vunpack.c.l.b16 %v377
        %v395 = vunpack.c.h.b16 %v377
        %v396 = vunpack.c.l.b16 %v378
        %v397 = vunpack.c.l.b16 %v379
        %v398 = vunpack.c.h.b16 %v379
        %v399 = vunpack.c.l.b16 %v380
        %v400 = vunpack.c.l.b16 %v381
        %v401 = vunpack.c.h.b16 %v381
        %v402 = vunpack.c.l.b16 %v382
        %v403 = vpack.c.b16 %v394, %v391
        %v404 = vpack.c.b16 %v395, %v392
        %v405 = vpack.c.b16 %v396, %v393
        %v406 = vpack.c.b16 %v400, %v397
        %v407 = vpack.c.b16 %v401, %v398
        %v408 = vpack.c.b16 %v402, %v399
        %vm415 = vcmask 261120
        %v417 = vsel %vm415, %v374, 0
        %419 = vmatpush.bf16.msra.mxu0 0
        %420 = vmatpush.bf16.msra.mxu0 0
        %421 = vmatpush.bf16.msra.mxu0 0
        %422 = vmatpush.bf16.msra.mxu0 0
        %423 = vmatpush.bf16.msra.mxu0 0
        %424 = vmatpush.bf16.msra.mxu0 0
        %425 = vmatpush.bf16.msra.mxu0 %v406
        %426 = vmatpush.bf16.msra.mxu0 %v403
        %427 = vmatmul.bf16.gmra.mxu0 %v417
        %v428 = vpop.f32.mrf.mxu0
        %v429 = vadd.f32 0.0, %v428
        %v430 = vpop.f32.mrf.mxu0
        %431 = vdwg.mxu0
        %432 = vmatpush.bf16.msra.mxu0 0
        %433 = vmatpush.bf16.msra.mxu0 0
        %434 = vmatpush.bf16.msra.mxu0 0
        %435 = vmatpush.bf16.msra.mxu0 0
        %436 = vmatpush.bf16.msra.mxu0 0
        %437 = vmatpush.bf16.msra.mxu0 0
        %438 = vmatpush.bf16.msra.mxu0 %v407
        %439 = vmatpush.bf16.msra.mxu0 %v404
        %440 = vmatmul.bf16.gmra.mxu0 %v417
        %v441 = vpop.f32.mrf.mxu0
        %v442 = vadd.f32 0.0, %v441
        %v443 = vpop.f32.mrf.mxu0
        %444 = vdwg.mxu0
        %445 = vmatpush.bf16.msra.mxu0 0
        %446 = vmatpush.bf16.msra.mxu0 0
        %447 = vmatpush.bf16.msra.mxu0 0
        %448 = vmatpush.bf16.msra.mxu0 0
        %449 = vmatpush.bf16.msra.mxu0 0
        %450 = vmatpush.bf16.msra.mxu0 0
        %451 = vmatpush.bf16.msra.mxu0 %v408
        %452 = vmatpush.bf16.msra.mxu0 %v405
        %453 = vmatmul.bf16.gmra.mxu0 %v417
        %v454 = vpop.f32.mrf.mxu0
        %v455 = vadd.f32 0.0, %v454
        %v456 = vpop.f32.mrf.mxu0
        %457 = vdwg.mxu0
        %v458 = vld [vmem:[%s306] sm:$0xf]
        %v459 = vunpack.c.l.bf16 %v458
        %v460 = vadd.f32 %v429, %v459
        %v461 = vpack.c.bf16 %v460, %v460
        %vm462 = vcmask 257024
        %463 = vst.msk [vmem:[#allocation2] sm:$0xf] %vm462, %v461
        %v464 = vld [vmem:[%s316] sm:$0xf]
        %v465 = vunpack.c.l.bf16 %v464
        %v466 = vadd.f32 %v442, %v465
        %v467 = vpack.c.bf16 %v466, %v466
        %s468 = scalar_lea.vmem [#allocation2], 4
        %469 = vst.msk [vmem:[%s468] sm:$0xf] %vm462, %v467
        %v470 = vld [vmem:[%s326] sm:$0xf]
        %v471 = vunpack.c.l.bf16 %v470
        %v472 = vadd.f32 %v455, %v471
        %v473 = vpack.c.bf16 %v472, %v472
        %s474 = scalar_lea.vmem [#allocation2], 8
        %475 = vst.msk [vmem:[%s474] sm:$0xf] %vm462, %v473
        %v476 = vlaneseq
        %v477 = vand.u32 %v476, 127
        %v478 = vlaneseq
        %v479 = vshrl.u32 %v478, 7
        %vm480 = vcmp.gt.s32.totalorder %v477, %v479
        %v481 = vsel %vm480, %v477, %v479
        %v482 = vstv %s370
        %vm483 = vcmp.lt.s32.totalorder %v481, %v482
        %vm484 = vcmp.le.s32.totalorder %v477, %v479
        %vm485 = vmand %vm483, %vm484
        %v486 = vld [vmem:[#allocation2] sm:$0xf]
        %s487 = sadd.s32 0, 1
        %s488 = smul.addr %s487, 4
        %s489 = scalar_lea.vmem [#allocation2], %s488
        %v490 = vld [vmem:[%s489] sm:$0xf]
        %s491 = sadd.s32 0, 2
        %s492 = smul.addr %s491, 4
        %s493 = scalar_lea.vmem [#allocation2], %s492
        %v494 = vld [vmem:[%s493] sm:$0xf]
        %495 = vmatpush.bf16.xpose.msra.mxu0 0
        %496 = vmatpush.bf16.xpose.msra.mxu0 0
        %497 = vmatpush.bf16.xpose.msra.mxu0 0
        %498 = vmatpush.bf16.xpose.msra.mxu0 0
        %499 = vmatpush.bf16.xpose.msra.mxu0 0
        %500 = vmatpush.bf16.xpose.msra.mxu0 0
        %501 = vmatpush.bf16.xpose.msra.mxu0 0
        %502 = vmatpush.bf16.xpose.msra.mxu0 %v490
        %503 = vmatmul.bf16.gmra.mxu0 %v486
        %v504 = vpop.f32.mrf.mxu0
        %v505 = vadd.f32 0.0, %v504
        %v506 = vpop.f32.mrf.mxu0
        %507 = vdwg.mxu0
        %v508 = vmul.f32 %v505, 0.35355338
        %v509 = vsel %vm485, %v508, -1e+09
        %vm510 = vcmask 64512
        %v511 = vsel %vm510, %v509, -inf
        %512 = vmax.xlane.f32.xlu0 %v511
        %v513 = vpop.xlane.xlu0 %512
        %v514 = vsub.f32 %v509, %v513
        %v515 = vmul.f32 %v514, 1.442695
        %v516 = vpow.pop %v515
        %v517 = vsel %vm510, %v516, 0.0
        %518 = vadd.xlane.f32.xlu0 %v517
        %v519 = vpop.xlane.xlu0 %518
        %v520 = vrcp.pop %v519
        %v521 = vmul.f32 %v516, %v520
        %v522 = vpack.c.bf16 %v521, %v521
        %v524 = vsel %vm510, %v522, 0
        %vm526 = vcmask 1043456
        %v528 = vsel %vm526, %v494, 0
        %530 = vmatpush.bf16.msra.mxu0 0
        %531 = vmatpush.bf16.msra.mxu0 0
        %532 = vmatpush.bf16.msra.mxu0 0
        %533 = vmatpush.bf16.msra.mxu0 0
        %534 = vmatpush.bf16.msra.mxu0 0
        %535 = vmatpush.bf16.msra.mxu0 0
        %536 = vmatpush.bf16.msra.mxu0 0
        %537 = vmatpush.bf16.msra.mxu0 %v528
        %538 = vmatmul.bf16.gmra.mxu0 %v524
        %v539 = vpop.f32.mrf.mxu0
        %v540 = vadd.f32 0.0, %v539
        %v541 = vpop.f32.mrf.mxu0
        %542 = vdwg.mxu0
        %v543 = vpack.c.bf16 %v540, %v540
        %544 = vst [vmem:[%s368] sm:$0xf] %v543
        %s545 = sand.u32 %s158, 1
        %s546 = scalar_lea.sflag [#allocation7], %s545
        %s547 = sand.u32 %s158, 1
        %s548 = smul.addr %s547, 4
        %s549 = scalar_lea.vmem [#allocation13], %s548
        // Predicated region
        $region61: #{tpu_custom_call.1} parent=39 // pred_check
          %p550 = pneg %p168
        $region62: #{tpu_custom_call.1} parent=39 // pred_check_branch
          %552 = sbr.rel (%p550) target = $region64
        $region63: #{tpu_custom_call.1} parent=39 // pred_region
          %554 = vsyncadd %s546, 0
          %s555 = smul.addr %s25, 4
          %s556 = scalar_lea.hbm %s6, %s555
          %s558 = sshll.u32 %s549, 4
          %s559 = int_to_ptr.vmem [resolvable:$true] %s558
          %s560 = sshll.u32 %s556, 4
          %s561 = int_to_ptr.hbm [resolvable:$true] %s560
          %563 = dma.vmem_to_hbm [thread:$0]  %s559, 64, %s561, %s546
        $region64: #{tpu_custom_call.1} parent=39 // pred_fallthru
          _
      $region40: #{tpu_custom_call.1} parent=5 // pred_fallthru
        _
      %p564 = scmp.le.s32.totalorder 2, %s20
      // Predicated region
      $region65: #{tpu_custom_call.1} parent=5 // pred_check
        %p565 = pneg %p564
      $region66: #{tpu_custom_call.1} parent=5 // pred_check_branch
        %567 = sbr.rel (%p565) target = $region68
      $region67: #{tpu_custom_call.1} parent=5 // pred_region
        %s568 = ssub.s32 %s20, 2
        // Predicated region
        $region69: #{tpu_custom_call.1} parent=67 // pred_check
          %p569 = pneg %p174
        $region70: #{tpu_custom_call.1} parent=67 // pred_check_branch
          %571 = sbr.rel (%p569) target = $region72
        $region71: #{tpu_custom_call.1} parent=67 // pred_region
          %s572 = sand.u32 %s159, 1
          %s573 = scalar_lea.sflag [#allocation7], %s572
          %s574 = sand.u32 %s159, 1
          %s575 = smul.addr %s574, 4
          %s576 = scalar_lea.vmem [#allocation13], %s575
          %578 = dma.done %s573, 64
        $region72: #{tpu_custom_call.1} parent=67 // pred_fallthru
          _
      $region68: #{tpu_custom_call.1} parent=5 // pred_fallthru
        _
    $region6: #{tpu_custom_call.1} parent=1 // loop_footer
      %s24 = sadd.s32 1, %s20
    $region7: #{tpu_custom_call.1} parent=1 // loop_footer_branch
      %19 = sbr.rel target = $region3
    $region8: #{tpu_custom_call.1} parent=1 // loop_exit
      _
    %579 = vsyncpa [#allocation6], 1
    %s580 = scalar_lea.sflag [#allocation6], 1
    %581 = vsyncpa %s580, 1
    %582 = vsyncpa [#allocation9], 1
    %583 = vsyncpa [#allocation7], 1
    %s584 = scalar_lea.sflag [#allocation7], 1
    %585 = vsyncpa %s584, 1

</llo_original>
